<compile_context>
chip_gen: v5e
topology: v5e:2x2
jax: 0.10.0
libtpu: 0.0.40
codegen_flags: <defaults>
</compile_context>

<pallas_src>
import functools
import math

import jax
import jax.numpy as jnp
from jax import lax
from jax.experimental import pallas as pl
from jax.experimental.pallas import tpu as pltpu

_LANE = 128
_SUBLANE = 8
_BIG = 1e30  # distance sentinel for padded codebook columns


def _round_up(n, m):
    return ((n + m - 1) // m) * m


def _vqvae_kernel(true_batch,
                  x_ref,
                  we0, be0, we1, be1, we2, be2,        # encoder params
                  emb, e2,                             # codebook (K_pad, D), sq-norms (1, K_pad)
                  wd0, bd0, wd1, bd1, whead, bhead,    # decoder params (+ fused mu|log_var head)
                  head_ref, onehot_ref, vqpart_ref):
    f32, bf16 = jnp.float32, jnp.bfloat16
    tb = x_ref.shape[0]

    # ---------------- Encoder: Linear->ReLU, Linear->ReLU, Linear ----------------
    # bf16 operands, f32 MXU accumulation.
    x = x_ref[...].astype(bf16)
    h = jnp.maximum(jnp.dot(x, we0[...], preferred_element_type=f32) + be0[...], 0.0)
    h = jnp.maximum(jnp.dot(h.astype(bf16), we1[...], preferred_element_type=f32) + be1[...], 0.0)
    latents = jnp.dot(h.astype(bf16), we2[...], preferred_element_type=f32) + be2[...]  # (TB, D) f32

    # ---------------- Vector quantizer (distances / argmin kept in f32) ----------------
    l2 = jnp.sum(latents * latents, axis=1, keepdims=True)                      # (TB, 1)
    cross = lax.dot_general(latents, emb[...],
                            dimension_numbers=(((1,), (1,)), ((), ())),
                            preferred_element_type=f32)                         # (TB, K_pad)
    dist = l2 + e2[...] - 2.0 * cross                                           # (TB, K_pad)

    kpad = dist.shape[1]
    iota = lax.broadcasted_iota(jnp.int32, dist.shape, 1)
    dmin = jnp.min(dist, axis=1, keepdims=True)
    # first index achieving the minimum (torch.argmin semantics)
    inds = jnp.min(jnp.where(dist == dmin, iota, kpad), axis=1, keepdims=True)  # (TB, 1)
    one_hot = (iota == inds).astype(f32)                                        # (TB, K_pad)
    q = jnp.dot(one_hot, emb[...], preferred_element_type=f32)                  # (TB, D)

    # vq_loss partial: masked sum of squared (q - latents).  Wrapper divides by
    # B*D and multiplies by (1 + beta): commitment*beta + embedding == mse*(1+beta)
    # as a forward value.
    rows = pl.program_id(0) * tb + lax.broadcasted_iota(jnp.int32, (tb, 1), 0)
    mask = (rows < true_batch).astype(f32)                                      # zero out batch padding
    diff = q - latents
    tile_sum = jnp.sum(diff * diff * mask)
    vqpart_ref[...] = jnp.full(vqpart_ref.shape, tile_sum, dtype=f32)

    onehot_ref[...] = one_hot

    # Straight-through estimator: forward value of z equals q.
    # TODO(synk): forward-only kernel; training would need a custom_vjp that
    # reproduces the distinct gradients of commitment/embedding losses and the
    # straight-through pass-through to the encoder.
    z = q.astype(bf16)

    # ---------------- Decoder: Linear->ReLU, Linear->ReLU, fused (mu | log_var) head ----
    h = jnp.maximum(jnp.dot(z, wd0[...], preferred_element_type=f32) + bd0[...], 0.0)
    h = jnp.maximum(jnp.dot(h.astype(bf16), wd1[...], preferred_element_type=f32) + bd1[...], 0.0)
    head_ref[...] = jnp.dot(h.astype(bf16), whead[...], preferred_element_type=f32) + bhead[...]


def _init_linear(key, fan_in, fan_out):
    """torch.nn.Linear default init: U(-1/sqrt(fan_in), 1/sqrt(fan_in))."""
    k_w, k_b = jax.random.split(key)
    bound = 1.0 / math.sqrt(fan_in)
    w = jax.random.uniform(k_w, (fan_in, fan_out), jnp.float32, -bound, bound)
    b = jax.random.uniform(k_b, (1, fan_out), jnp.float32, -bound, bound)
    return w, b


def make_vqvae_params(key, input_dims, latent_dims, codes,
                      hidden_sizes=(256, 128), output_dims=None):
    output_dims = input_dims if output_dims is None else output_dims
    h0, h1 = hidden_sizes
    keys = jax.random.split(key, 8)

    # Encoder: input -> h0 -> h1 -> latent
    we0, be0 = _init_linear(keys[0], input_dims, h0)
    we1, be1 = _init_linear(keys[1], h0, h1)
    we2, be2 = _init_linear(keys[2], h1, latent_dims)

    # VQ codebook: Embedding(K, D) with uniform(-1/K, 1/K)
    emb = jax.random.uniform(keys[3], (codes, latent_dims), jnp.float32,
                             -1.0 / codes, 1.0 / codes)

    # Decoder: latent -> h1 -> h0 -> output (mu head + log_var head)
    wd0, bd0 = _init_linear(keys[4], latent_dims, h1)
    wd1, bd1 = _init_linear(keys[5], h1, h0)
    wmu, bmu = _init_linear(keys[6], h0, output_dims)
    wlv, blv = _init_linear(keys[7], h0, output_dims)

    return dict(we0=we0, be0=be0, we1=we1, be1=be1, we2=we2, be2=be2,
                emb=emb,
                wd0=wd0, bd0=bd0, wd1=wd1, bd1=bd1,
                wmu=wmu, bmu=bmu, wlv=wlv, blv=blv,
                output_dims=output_dims, codes=codes)


def prepare_vqvae_params(params):
    """One-time, per-parameter prep: bf16 weights, fused+padded head, padded
    codebook with precomputed squared norms."""
    bf16 = jnp.bfloat16
    out_dims = int(params["output_dims"])
    K = int(params["codes"])
    emb = params["emb"]
    D = emb.shape[1]
    h0 = params["wmu"].shape[0]

    K_pad = _round_up(K, _LANE)
    emb_pad = jnp.zeros((K_pad, D), jnp.float32).at[:K].set(emb)
    e2 = jnp.sum(emb * emb, axis=1)
    e2_pad = jnp.full((K_pad,), _BIG, jnp.float32).at[:K].set(e2).reshape(1, K_pad)

    head_pad = _round_up(2 * out_dims, _LANE)
    whead = jnp.zeros((h0, head_pad), jnp.float32)
    whead = whead.at[:, :out_dims].set(params["wmu"])
    whead = whead.at[:, out_dims:2 * out_dims].set(params["wlv"])
    bhead = jnp.zeros((1, head_pad), jnp.float32)
    bhead = bhead.at[:, :out_dims].set(params["bmu"])
    bhead = bhead.at[:, out_dims:2 * out_dims].set(params["blv"])

    prep = dict(
        we0=params["we0"].astype(bf16), be0=params["be0"],
        we1=params["we1"].astype(bf16), be1=params["be1"],
        we2=params["we2"].astype(bf16), be2=params["be2"],
        emb_pad=emb_pad, e2_pad=e2_pad,
        wd0=params["wd0"].astype(bf16), bd0=params["bd0"],
        wd1=params["wd1"].astype(bf16), bd1=params["bd1"],
        whead=whead.astype(bf16), bhead=bhead,
    )
    meta = dict(output_dims=out_dims, codes=K, latent_dims=D,
                codes_pad=K_pad, head_pad=head_pad)
    return prep, meta


def vqvae_forward(x, prep, meta, beta=1.25):
    # Equivalent of `x.view(1, -1) if len(x.size()) < 2 else x` (glue, not kernel).
    # TODO(synk): `self.scaler` is host-side (numpy on CPU) preprocessing; no Pallas equivalent.
    if x.ndim < 2:
        x = x.reshape(1, -1)
    x = x.astype(jnp.float32)
    B, in_dims = x.shape
    out_dims = meta["output_dims"]
    K = meta["codes"]
    D = meta["latent_dims"]
    K_pad = meta["codes_pad"]
    head_pad = meta["head_pad"]

    # Batch tile: multiple of 8 sublanes, capped so VMEM use is bounded
    # independent of B (budgeted well under v7x's 64 MiB / 32 MiB scoped).
    TB = min(512, _round_up(B, _SUBLANE))
    n_tiles = pl.cdiv(B, TB)
    B_pad = n_tiles * TB
    if B_pad != B:
        x = jnp.pad(x, ((0, B_pad - B), (0, 0)))

    param_order = ("we0", "be0", "we1", "be1", "we2", "be2",
                   "emb_pad", "e2_pad",
                   "wd0", "bd0", "wd1", "bd1", "whead", "bhead")
    param_arrays = [prep[k] for k in param_order]

    def resident_spec(a):
        # Weight/bias stays in VMEM for the whole grid (block index constant).
        return pl.BlockSpec(a.shape, lambda i: (0, 0))

    in_specs = ([pl.BlockSpec((TB, in_dims), lambda i: (i, 0))]
                + [resident_spec(a) for a in param_arrays])
    out_specs = (
        pl.BlockSpec((TB, head_pad), lambda i: (i, 0)),           # fused mu|log_var
        pl.BlockSpec((TB, K_pad), lambda i: (i, 0)),              # one-hot (lane padded)
        pl.BlockSpec((1, _SUBLANE, _LANE), lambda i: (i, 0, 0)),  # per-tile vq partial
    )
    out_shape = (
        jax.ShapeDtypeStruct((B_pad, head_pad), jnp.float32),
        jax.ShapeDtypeStruct((B_pad, K_pad), jnp.float32),
        jax.ShapeDtypeStruct((n_tiles, _SUBLANE, _LANE), jnp.float32),
    )

    h0 = prep["we0"].shape[1]
    h1 = prep["we1"].shape[1]
    flops = 2 * B_pad * (in_dims * h0 + h0 * h1 + h1 * D + 2 * D * K_pad
                         + D * h1 + h1 * h0 + h0 * head_pad)
    param_bytes = sum(int(a.size) * a.dtype.itemsize for a in param_arrays)
    bytes_accessed = (param_bytes
                      + 4 * B_pad * in_dims
                      + 4 * B_pad * (head_pad + K_pad)
                      + 4 * n_tiles * _SUBLANE * _LANE)

    kernel = functools.partial(_vqvae_kernel, B)
    head, onehot, vqpart = pl.pallas_call(
        kernel,
        out_shape=out_shape,
        grid_spec=pltpu.PrefetchScalarGridSpec(
            num_scalar_prefetch=0,
            grid=(n_tiles,),
            in_specs=in_specs,
            out_specs=out_specs,
        ),
        compiler_params=pltpu.CompilerParams(
            dimension_semantics=("parallel",),
            vmem_limit_bytes=32 * 1024 * 1024,
        ),
        cost_estimate=pl.CostEstimate(flops=flops, transcendentals=0,
                                      bytes_accessed=bytes_accessed),
    )(x, *param_arrays)

    x_hat = head[:B, :out_dims]
    x_hat_var = head[:B, out_dims:2 * out_dims]
    one_hot = onehot[:B, :K]
    vq_loss = (1.0 + float(beta)) * jnp.sum(vqpart[:, 0, 0]) / float(B * D)
    return x_hat, x_hat_var, one_hot, vq_loss


def _vqvae_reference(x, prep, meta, beta):
    """Pure-JAX reference reproducing the kernel math (same bf16 weights)."""
    f32, bf16 = jnp.float32, jnp.bfloat16
    if x.ndim < 2:
        x = x.reshape(1, -1)
    x = x.astype(f32)
    K, od = meta["codes"], meta["output_dims"]
    h = jnp.maximum(jnp.dot(x.astype(bf16), prep["we0"], preferred_element_type=f32) + prep["be0"], 0.0)
    h = jnp.maximum(jnp.dot(h.astype(bf16), prep["we1"], preferred_element_type=f32) + prep["be1"], 0.0)
    lat = jnp.dot(h.astype(bf16), prep["we2"], preferred_element_type=f32) + prep["be2"]
    emb = prep["emb_pad"][:K]
    dist = (jnp.sum(lat * lat, axis=1, keepdims=True)
            + jnp.sum(emb * emb, axis=1)[None, :]
            - 2.0 * jnp.dot(lat, emb.T, preferred_element_type=f32))
    inds = jnp.argmin(dist, axis=1)
    one_hot = jax.nn.one_hot(inds, K, dtype=f32)
    q = jnp.dot(one_hot, emb, preferred_element_type=f32)
    vq_loss = (1.0 + beta) * jnp.mean((q - lat) ** 2)
    h = jnp.maximum(jnp.dot(q.astype(bf16), prep["wd0"], preferred_element_type=f32) + prep["bd0"], 0.0)
    h = jnp.maximum(jnp.dot(h.astype(bf16), prep["wd1"], preferred_element_type=f32) + prep["bd1"], 0.0)
    head = jnp.dot(h.astype(bf16), prep["whead"], preferred_element_type=f32) + prep["bhead"]
    return head[:, :od], head[:, od:2 * od], one_hot, vq_loss


if __name__ == "__main__":
    key = jax.random.PRNGKey(0)
    k_param, k_x = jax.random.split(key)

    batch = 8
    input_dims = 16
    latent_dims = 8
    codes = 16
    hidden_sizes = (256, 128)   # module default
    beta = 1.25                 # VQVAE.__init__ default

    params = make_vqvae_params(k_param, input_dims, latent_dims, codes, hidden_sizes)
    prep, meta = prepare_vqvae_params(params)
    x = jax.random.normal(k_x, (batch, input_dims), dtype=jnp.float32)

    x_hat, x_hat_var, one_hot, vq_loss = vqvae_forward(x, prep, meta, beta)
    jax.block_until_ready((x_hat, x_hat_var, one_hot, vq_loss))

    assert x_hat.shape == (batch, input_dims)
    assert x_hat_var.shape == (batch, input_dims)
    assert one_hot.shape == (batch, codes)
    assert vq_loss.shape == ()
    # each row of the one-hot must select exactly one code
    assert bool(jnp.all(jnp.sum(one_hot, axis=1) == 1.0))

    # check against a pure-JAX reference that uses the same bf16 weights
    r_hat, r_var, r_oh, r_loss = _vqvae_reference(x, prep, meta, beta)
    assert bool(jnp.allclose(x_hat, r_hat, atol=5e-2, rtol=5e-2))
    assert bool(jnp.allclose(x_hat_var, r_var, atol=5e-2, rtol=5e-2))
    assert bool(jnp.allclose(vq_loss, r_loss, atol=5e-3, rtol=5e-2))

    print("KERNEL_OK")
</pallas_src>

<mosaic_0001>
module attributes {stable_mosaic.version = 11 : i64} {
  func.func @_vqvae_kernel(%arg0: i32, %arg1: memref<8x16xf32, #tpu.memory_space<vmem>>, %arg2: memref<16x256xbf16, #tpu.memory_space<vmem>>, %arg3: memref<1x256xf32, #tpu.memory_space<vmem>>, %arg4: memref<256x128xbf16, #tpu.memory_space<vmem>>, %arg5: memref<1x128xf32, #tpu.memory_space<vmem>>, %arg6: memref<128x8xbf16, #tpu.memory_space<vmem>>, %arg7: memref<1x8xf32, #tpu.memory_space<vmem>>, %arg8: memref<128x8xf32, #tpu.memory_space<vmem>>, %arg9: memref<1x128xf32, #tpu.memory_space<vmem>>, %arg10: memref<8x128xbf16, #tpu.memory_space<vmem>>, %arg11: memref<1x128xf32, #tpu.memory_space<vmem>>, %arg12: memref<128x256xbf16, #tpu.memory_space<vmem>>, %arg13: memref<1x256xf32, #tpu.memory_space<vmem>>, %arg14: memref<256x128xbf16, #tpu.memory_space<vmem>>, %arg15: memref<1x128xf32, #tpu.memory_space<vmem>>, %arg16: memref<8x128xf32, #tpu.memory_space<vmem>>, %arg17: memref<8x128xf32, #tpu.memory_space<vmem>>, %arg18: memref<1x8x128xf32, #tpu.memory_space<vmem>>) attributes {dimension_semantics = [#tpu.dimension_semantics<parallel>], iteration_bounds = array<i64: 1>, scalar_prefetch = 0 : i64, scratch_operands = 0 : i64, tpu.core_type = #tpu.core_type<tc>, window_params = [{transform_indices = @transform_0, window_bounds = array<i64: 8, 16>}, {pipeline_mode = #tpu.pipeline_mode<synchronous>, transform_indices = @transform_1, window_bounds = array<i64: 16, 256>}, {pipeline_mode = #tpu.pipeline_mode<synchronous>, transform_indices = @transform_2, window_bounds = array<i64: 1, 256>}, {pipeline_mode = #tpu.pipeline_mode<synchronous>, transform_indices = @transform_3, window_bounds = array<i64: 256, 128>}, {pipeline_mode = #tpu.pipeline_mode<synchronous>, transform_indices = @transform_4, window_bounds = array<i64: 1, 128>}, {pipeline_mode = #tpu.pipeline_mode<synchronous>, transform_indices = @transform_5, window_bounds = array<i64: 128, 8>}, {pipeline_mode = #tpu.pipeline_mode<synchronous>, transform_indices = @transform_6, window_bounds = array<i64: 1, 8>}, {pipeline_mode = #tpu.pipeline_mode<synchronous>, transform_indices = @transform_7, window_bounds = array<i64: 128, 8>}, {pipeline_mode = #tpu.pipeline_mode<synchronous>, transform_indices = @transform_8, window_bounds = array<i64: 1, 128>}, {pipeline_mode = #tpu.pipeline_mode<synchronous>, transform_indices = @transform_9, window_bounds = array<i64: 8, 128>}, {pipeline_mode = #tpu.pipeline_mode<synchronous>, transform_indices = @transform_10, window_bounds = array<i64: 1, 128>}, {pipeline_mode = #tpu.pipeline_mode<synchronous>, transform_indices = @transform_11, window_bounds = array<i64: 128, 256>}, {pipeline_mode = #tpu.pipeline_mode<synchronous>, transform_indices = @transform_12, window_bounds = array<i64: 1, 256>}, {pipeline_mode = #tpu.pipeline_mode<synchronous>, transform_indices = @transform_13, window_bounds = array<i64: 256, 128>}, {pipeline_mode = #tpu.pipeline_mode<synchronous>, transform_indices = @transform_14, window_bounds = array<i64: 1, 128>}, {transform_indices = @transform_15, window_bounds = array<i64: 8, 128>}, {transform_indices = @transform_16, window_bounds = array<i64: 8, 128>}, {transform_indices = @transform_17, window_bounds = array<i64: 1, 8, 128>}]} {
    %c0 = arith.constant 0 : index
    %c0_0 = arith.constant 0 : index
    %0 = vector.load %arg1[%c0, %c0_0] : memref<8x16xf32, #tpu.memory_space<vmem>>, vector<8x16xf32>
    %1 = arith.truncf %0 : vector<8x16xf32> to vector<8x16xbf16>
    %c0_1 = arith.constant 0 : index
    %c0_2 = arith.constant 0 : index
    %2 = vector.load %arg2[%c0_1, %c0_2] : memref<16x256xbf16, #tpu.memory_space<vmem>>, vector<16x256xbf16>
    %cst = arith.constant dense<0.000000e+00> : vector<8x256xf32>
    %3 = tpu.matmul %1, %2, %cst {dimension_numbers = #tpu.dot_dimension_numbers<[1], [0], [0], [1], [0, 0, 1, 1], [], []>} : vector<8x16xbf16>, vector<16x256xbf16>, vector<8x256xf32> -> vector<8x256xf32>
    %c0_3 = arith.constant 0 : index
    %c0_4 = arith.constant 0 : index
    %4 = vector.load %arg3[%c0_3, %c0_4] : memref<1x256xf32, #tpu.memory_space<vmem>>, vector<1x256xf32>
    %5 = vector.broadcast %4 : vector<1x256xf32> to vector<8x256xf32>
    %6 = arith.addf %3, %5 : vector<8x256xf32>
    %cst_5 = arith.constant 0.000000e+00 : f32
    %7 = vector.broadcast %cst_5 : f32 to vector<8x256xf32>
    %8 = arith.maximumf %6, %7 : vector<8x256xf32>
    %9 = arith.truncf %8 : vector<8x256xf32> to vector<8x256xbf16>
    %c0_6 = arith.constant 0 : index
    %c0_7 = arith.constant 0 : index
    %10 = vector.load %arg4[%c0_6, %c0_7] : memref<256x128xbf16, #tpu.memory_space<vmem>>, vector<256x128xbf16>
    %cst_8 = arith.constant dense<0.000000e+00> : vector<8x128xf32>
    %11 = tpu.matmul %9, %10, %cst_8 {dimension_numbers = #tpu.dot_dimension_numbers<[1], [0], [0], [1], [0, 0, 1, 1], [], []>} : vector<8x256xbf16>, vector<256x128xbf16>, vector<8x128xf32> -> vector<8x128xf32>
    %c0_9 = arith.constant 0 : index
    %c0_10 = arith.constant 0 : index
    %12 = vector.load %arg5[%c0_9, %c0_10] : memref<1x128xf32, #tpu.memory_space<vmem>>, vector<1x128xf32>
    %13 = vector.broadcast %12 : vector<1x128xf32> to vector<8x128xf32>
    %14 = arith.addf %11, %13 : vector<8x128xf32>
    %cst_11 = arith.constant 0.000000e+00 : f32
    %15 = vector.broadcast %cst_11 : f32 to vector<8x128xf32>
    %16 = arith.maximumf %14, %15 : vector<8x128xf32>
    %17 = arith.truncf %16 : vector<8x128xf32> to vector<8x128xbf16>
    %c0_12 = arith.constant 0 : index
    %c0_13 = arith.constant 0 : index
    %18 = vector.load %arg6[%c0_12, %c0_13] : memref<128x8xbf16, #tpu.memory_space<vmem>>, vector<128x8xbf16>
    %cst_14 = arith.constant dense<0.000000e+00> : vector<8x8xf32>
    %19 = tpu.matmul %17, %18, %cst_14 {dimension_numbers = #tpu.dot_dimension_numbers<[1], [0], [0], [1], [0, 0, 1, 1], [], []>} : vector<8x128xbf16>, vector<128x8xbf16>, vector<8x8xf32> -> vector<8x8xf32>
    %c0_15 = arith.constant 0 : index
    %c0_16 = arith.constant 0 : index
    %20 = vector.load %arg7[%c0_15, %c0_16] : memref<1x8xf32, #tpu.memory_space<vmem>>, vector<1x8xf32>
    %21 = vector.broadcast %20 : vector<1x8xf32> to vector<8x8xf32>
    %22 = arith.addf %19, %21 : vector<8x8xf32>
    %23 = arith.mulf %22, %22 : vector<8x8xf32>
    %cst_17 = arith.constant dense<0.000000e+00> : vector<8xf32>
    %24 = vector.multi_reduction <add>, %23, %cst_17 [1] : vector<8x8xf32> to vector<8xf32>
    %25 = vector.shape_cast %24 : vector<8xf32> to vector<8x1xf32>
    %c0_18 = arith.constant 0 : index
    %c0_19 = arith.constant 0 : index
    %26 = vector.load %arg8[%c0_18, %c0_19] : memref<128x8xf32, #tpu.memory_space<vmem>>, vector<128x8xf32>
    %cst_20 = arith.constant dense<0.000000e+00> : vector<8x128xf32>
    %27 = tpu.matmul %22, %26, %cst_20 {dimension_numbers = #tpu.dot_dimension_numbers<[1], [1], [0], [0], [0, 0, 1, 0], [], []>} : vector<8x8xf32>, vector<128x8xf32>, vector<8x128xf32> -> vector<8x128xf32>
    %c0_21 = arith.constant 0 : index
    %c0_22 = arith.constant 0 : index
    %28 = vector.load %arg9[%c0_21, %c0_22] : memref<1x128xf32, #tpu.memory_space<vmem>>, vector<1x128xf32>
    %29 = vector.broadcast %25 : vector<8x1xf32> to vector<8x128xf32>
    %30 = vector.broadcast %28 : vector<1x128xf32> to vector<8x128xf32>
    %31 = arith.addf %29, %30 : vector<8x128xf32>
    %cst_23 = arith.constant 2.000000e+00 : f32
    %32 = vector.broadcast %cst_23 : f32 to vector<8x128xf32>
    %33 = arith.mulf %32, %27 : vector<8x128xf32>
    %34 = arith.subf %31, %33 : vector<8x128xf32>
    %35 = tpu.iota {dimensions = array<i32: 1>} : vector<8x128xi32>
    %cst_24 = arith.constant dense<0x7F800000> : vector<8xf32>
    %36 = vector.multi_reduction <minimumf>, %34, %cst_24 [1] : vector<8x128xf32> to vector<8xf32>
    %37 = vector.shape_cast %36 : vector<8xf32> to vector<8x1xf32>
    %38 = vector.broadcast %37 : vector<8x1xf32> to vector<8x128xf32>
    %39 = arith.cmpf oeq, %34, %38 : vector<8x128xf32>
    %c128_i32 = arith.constant 128 : i32
    %40 = vector.broadcast %c128_i32 : i32 to vector<8x128xi32>
    %41 = arith.select %39, %35, %40 : vector<8x128xi1>, vector<8x128xi32>
    %cst_25 = arith.constant dense<2147483647> : vector<8xi32>
    %42 = vector.multi_reduction <minsi>, %41, %cst_25 [1] : vector<8x128xi32> to vector<8xi32>
    %43 = vector.shape_cast %42 : vector<8xi32> to vector<8x1xi32>
    %44 = vector.broadcast %43 : vector<8x1xi32> to vector<8x128xi32>
    %45 = arith.cmpi eq, %35, %44 : vector<8x128xi32>
    %46 = arith.extui %45 : vector<8x128xi1> to vector<8x128xi32>
    %47 = arith.sitofp %46 : vector<8x128xi32> to vector<8x128xf32>
    %c0_26 = arith.constant 0 : index
    %c0_27 = arith.constant 0 : index
    %48 = vector.load %arg8[%c0_26, %c0_27] : memref<128x8xf32, #tpu.memory_space<vmem>>, vector<128x8xf32>
    %cst_28 = arith.constant dense<0.000000e+00> : vector<8x8xf32>
    %49 = tpu.matmul %47, %48, %cst_28 {dimension_numbers = #tpu.dot_dimension_numbers<[1], [0], [0], [1], [0, 0, 1, 1], [], []>} : vector<8x128xf32>, vector<128x8xf32>, vector<8x8xf32> -> vector<8x8xf32>
    %c8_i32 = arith.constant 8 : i32
    %50 = arith.muli %arg0, %c8_i32 : i32
    %51 = tpu.iota {dimensions = array<i32: 0>} : vector<8x1xi32>
    %52 = vector.broadcast %50 : i32 to vector<8x1xi32>
    %53 = arith.addi %52, %51 : vector<8x1xi32>
    %c8_i32_29 = arith.constant 8 : i32
    %54 = vector.broadcast %c8_i32_29 : i32 to vector<8x1xi32>
    %55 = arith.cmpi slt, %53, %54 : vector<8x1xi32>
    %56 = arith.extui %55 : vector<8x1xi1> to vector<8x1xi32>
    %57 = arith.sitofp %56 : vector<8x1xi32> to vector<8x1xf32>
    %58 = arith.subf %49, %22 : vector<8x8xf32>
    %59 = arith.mulf %58, %58 : vector<8x8xf32>
    %60 = vector.broadcast %57 : vector<8x1xf32> to vector<8x8xf32>
    %61 = arith.mulf %59, %60 : vector<8x8xf32>
    %62 = vector.shape_cast %61 : vector<8x8xf32> to vector<1x8x8xf32>
    %cst_30 = arith.constant dense<0.000000e+00> : vector<1xf32>
    %63 = vector.multi_reduction <add>, %62, %cst_30 [1, 2] : vector<1x8x8xf32> to vector<1xf32>
    %64 = vector.shape_cast %63 : vector<1xf32> to vector<1x1x1xf32>
    %65 = vector.extract %64[0, 0, 0] : f32 from vector<1x1x1xf32>
    %66 = vector.broadcast %65 : f32 to vector<1x8x128xf32>
    %c0_31 = arith.constant 0 : index
    %c0_32 = arith.constant 0 : index
    %c0_33 = arith.constant 0 : index
    %67 = vector.load %arg18[%c0_31, %c0_32, %c0_33] : memref<1x8x128xf32, #tpu.memory_space<vmem>>, vector<1x8x128xf32>
    tpu.vector_store %arg18[%c0_31, %c0_32, %c0_33], %66 {strides = array<i32>} : memref<1x8x128xf32, #tpu.memory_space<vmem>>, vector<1x8x128xf32>,
    %c0_34 = arith.constant 0 : index
    %c0_35 = arith.constant 0 : index
    %68 = vector.load %arg17[%c0_34, %c0_35] : memref<8x128xf32, #tpu.memory_space<vmem>>, vector<8x128xf32>
    tpu.vector_store %arg17[%c0_34, %c0_35], %47 {strides = array<i32>} : memref<8x128xf32, #tpu.memory_space<vmem>>, vector<8x128xf32>,
    %69 = arith.truncf %49 : vector<8x8xf32> to vector<8x8xbf16>
    %c0_36 = arith.constant 0 : index
    %c0_37 = arith.constant 0 : index
    %70 = vector.load %arg10[%c0_36, %c0_37] : memref<8x128xbf16, #tpu.memory_space<vmem>>, vector<8x128xbf16>
    %cst_38 = arith.constant dense<0.000000e+00> : vector<8x128xf32>
    %71 = tpu.matmul %69, %70, %cst_38 {dimension_numbers = #tpu.dot_dimension_numbers<[1], [0], [0], [1], [0, 0, 1, 1], [], []>} : vector<8x8xbf16>, vector<8x128xbf16>, vector<8x128xf32> -> vector<8x128xf32>
    %c0_39 = arith.constant 0 : index
    %c0_40 = arith.constant 0 : index
    %72 = vector.load %arg11[%c0_39, %c0_40] : memref<1x128xf32, #tpu.memory_space<vmem>>, vector<1x128xf32>
    %73 = vector.broadcast %72 : vector<1x128xf32> to vector<8x128xf32>
    %74 = arith.addf %71, %73 : vector<8x128xf32>
    %cst_41 = arith.constant 0.000000e+00 : f32
    %75 = vector.broadcast %cst_41 : f32 to vector<8x128xf32>
    %76 = arith.maximumf %74, %75 : vector<8x128xf32>
    %77 = arith.truncf %76 : vector<8x128xf32> to vector<8x128xbf16>
    %c0_42 = arith.constant 0 : index
    %c0_43 = arith.constant 0 : index
    %78 = vector.load %arg12[%c0_42, %c0_43] : memref<128x256xbf16, #tpu.memory_space<vmem>>, vector<128x256xbf16>
    %cst_44 = arith.constant dense<0.000000e+00> : vector<8x256xf32>
    %79 = tpu.matmul %77, %78, %cst_44 {dimension_numbers = #tpu.dot_dimension_numbers<[1], [0], [0], [1], [0, 0, 1, 1], [], []>} : vector<8x128xbf16>, vector<128x256xbf16>, vector<8x256xf32> -> vector<8x256xf32>
    %c0_45 = arith.constant 0 : index
    %c0_46 = arith.constant 0 : index
    %80 = vector.load %arg13[%c0_45, %c0_46] : memref<1x256xf32, #tpu.memory_space<vmem>>, vector<1x256xf32>
    %81 = vector.broadcast %80 : vector<1x256xf32> to vector<8x256xf32>
    %82 = arith.addf %79, %81 : vector<8x256xf32>
    %cst_47 = arith.constant 0.000000e+00 : f32
    %83 = vector.broadcast %cst_47 : f32 to vector<8x256xf32>
    %84 = arith.maximumf %82, %83 : vector<8x256xf32>
    %85 = arith.truncf %84 : vector<8x256xf32> to vector<8x256xbf16>
    %c0_48 = arith.constant 0 : index
    %c0_49 = arith.constant 0 : index
    %86 = vector.load %arg14[%c0_48, %c0_49] : memref<256x128xbf16, #tpu.memory_space<vmem>>, vector<256x128xbf16>
    %cst_50 = arith.constant dense<0.000000e+00> : vector<8x128xf32>
    %87 = tpu.matmul %85, %86, %cst_50 {dimension_numbers = #tpu.dot_dimension_numbers<[1], [0], [0], [1], [0, 0, 1, 1], [], []>} : vector<8x256xbf16>, vector<256x128xbf16>, vector<8x128xf32> -> vector<8x128xf32>
    %c0_51 = arith.constant 0 : index
    %c0_52 = arith.constant 0 : index
    %88 = vector.load %arg15[%c0_51, %c0_52] : memref<1x128xf32, #tpu.memory_space<vmem>>, vector<1x128xf32>
    %89 = vector.broadcast %88 : vector<1x128xf32> to vector<8x128xf32>
    %90 = arith.addf %87, %89 : vector<8x128xf32>
    %c0_53 = arith.constant 0 : index
    %c0_54 = arith.constant 0 : index
    %91 = vector.load %arg16[%c0_53, %c0_54] : memref<8x128xf32, #tpu.memory_space<vmem>>, vector<8x128xf32>
    tpu.vector_store %arg16[%c0_53, %c0_54], %90 {strides = array<i32>} : memref<8x128xf32, #tpu.memory_space<vmem>>, vector<8x128xf32>,
    return
  }
  func.func @transform_0(%arg0: i32) -> (i32, i32) {
    %c0_i32 = arith.constant 0 : i32
    %c0_i32_0 = arith.constant 0 : i32
    return %arg0, %c0_i32 : i32, i32
  }
  func.func @transform_1(%arg0: i32) -> (i32, i32) {
    %c0_i32 = arith.constant 0 : i32
    %c0_i32_0 = arith.constant 0 : i32
    %c0_i32_1 = arith.constant 0 : i32
    return %c0_i32, %c0_i32_0 : i32, i32
  }
  func.func @transform_2(%arg0: i32) -> (i32, i32) {
    %c0_i32 = arith.constant 0 : i32
    %c0_i32_0 = arith.constant 0 : i32
    %c0_i32_1 = arith.constant 0 : i32
    return %c0_i32, %c0_i32_0 : i32, i32
  }
  func.func @transform_3(%arg0: i32) -> (i32, i32) {
    %c0_i32 = arith.constant 0 : i32
    %c0_i32_0 = arith.constant 0 : i32
    %c0_i32_1 = arith.constant 0 : i32
    return %c0_i32, %c0_i32_0 : i32, i32
  }
  func.func @transform_4(%arg0: i32) -> (i32, i32) {
    %c0_i32 = arith.constant 0 : i32
    %c0_i32_0 = arith.constant 0 : i32
    %c0_i32_1 = arith.constant 0 : i32
    return %c0_i32, %c0_i32_0 : i32, i32
  }
  func.func @transform_5(%arg0: i32) -> (i32, i32) {
    %c0_i32 = arith.constant 0 : i32
    %c0_i32_0 = arith.constant 0 : i32
    %c0_i32_1 = arith.constant 0 : i32
    return %c0_i32, %c0_i32_0 : i32, i32
  }
  func.func @transform_6(%arg0: i32) -> (i32, i32) {
    %c0_i32 = arith.constant 0 : i32
    %c0_i32_0 = arith.constant 0 : i32
    %c0_i32_1 = arith.constant 0 : i32
    return %c0_i32, %c0_i32_0 : i32, i32
  }
  func.func @transform_7(%arg0: i32) -> (i32, i32) {
    %c0_i32 = arith.constant 0 : i32
    %c0_i32_0 = arith.constant 0 : i32
    %c0_i32_1 = arith.constant 0 : i32
    return %c0_i32, %c0_i32_0 : i32, i32
  }
  func.func @transform_8(%arg0: i32) -> (i32, i32) {
    %c0_i32 = arith.constant 0 : i32
    %c0_i32_0 = arith.constant 0 : i32
    %c0_i32_1 = arith.constant 0 : i32
    return %c0_i32, %c0_i32_0 : i32, i32
  }
  func.func @transform_9(%arg0: i32) -> (i32, i32) {
    %c0_i32 = arith.constant 0 : i32
    %c0_i32_0 = arith.constant 0 : i32
    %c0_i32_1 = arith.constant 0 : i32
    return %c0_i32, %c0_i32_0 : i32, i32
  }
  func.func @transform_10(%arg0: i32) -> (i32, i32) {
    %c0_i32 = arith.constant 0 : i32
    %c0_i32_0 = arith.constant 0 : i32
    %c0_i32_1 = arith.constant 0 : i32
    return %c0_i32, %c0_i32_0 : i32, i32
  }
  func.func @transform_11(%arg0: i32) -> (i32, i32) {
    %c0_i32 = arith.constant 0 : i32
    %c0_i32_0 = arith.constant 0 : i32
    %c0_i32_1 = arith.constant 0 : i32
    return %c0_i32, %c0_i32_0 : i32, i32
  }
  func.func @transform_12(%arg0: i32) -> (i32, i32) {
    %c0_i32 = arith.constant 0 : i32
    %c0_i32_0 = arith.constant 0 : i32
    %c0_i32_1 = arith.constant 0 : i32
    return %c0_i32, %c0_i32_0 : i32, i32
  }
  func.func @transform_13(%arg0: i32) -> (i32, i32) {
    %c0_i32 = arith.constant 0 : i32
    %c0_i32_0 = arith.constant 0 : i32
    %c0_i32_1 = arith.constant 0 : i32
    return %c0_i32, %c0_i32_0 : i32, i32
  }
  func.func @transform_14(%arg0: i32) -> (i32, i32) {
    %c0_i32 = arith.constant 0 : i32
    %c0_i32_0 = arith.constant 0 : i32
    %c0_i32_1 = arith.constant 0 : i32
    return %c0_i32, %c0_i32_0 : i32, i32
  }
  func.func @transform_15(%arg0: i32) -> (i32, i32) {
    %c0_i32 = arith.constant 0 : i32
    %c0_i32_0 = arith.constant 0 : i32
    return %arg0, %c0_i32 : i32, i32
  }
  func.func @transform_16(%arg0: i32) -> (i32, i32) {
    %c0_i32 = arith.constant 0 : i32
    %c0_i32_0 = arith.constant 0 : i32
    return %arg0, %c0_i32 : i32, i32
  }
  func.func @transform_17(%arg0: i32) -> (i32, i32, i32) {
    %c0_i32 = arith.constant 0 : i32
    %c0_i32_0 = arith.constant 0 : i32
    %c0_i32_1 = arith.constant 0 : i32
    return %arg0, %c0_i32, %c0_i32_0 : i32, i32, i32
  }
}

</mosaic_0001>

<llo_original>
// kernel: tpu_custom_call.1
$region0: #{tpu_custom_call.1}
  #allocation0 [shape = 'u32[]', space=smem, size = 0x4, offset = 0x4, fixed_abs, tag = 'smem constant byte address 0x4 - core index']
  #allocation1 [shape = 'u32[72,128]{1,0:T(1,128)}', space=vmem, size = 0x9000, scoped, tag = 'internal scratch']
  %s0 = inlined_call_operand.vmem [shape: f32[8,16], index: 0, kind: input, shape index: {}]
  %s1 = inlined_call_operand.vmem [shape: bf16[16,256], index: 1, kind: input, shape index: {}]
  %s2 = inlined_call_operand.vmem [shape: f32[1,256], index: 2, kind: input, shape index: {}]
  %s3 = inlined_call_operand.vmem [shape: bf16[256,128], index: 3, kind: input, shape index: {}]
  %s4 = inlined_call_operand.vmem [shape: f32[1,128], index: 4, kind: input, shape index: {}]
  %s5 = inlined_call_operand.vmem [shape: bf16[128,8], index: 5, kind: input, shape index: {}]
  %s6 = inlined_call_operand.vmem [shape: f32[1,8], index: 6, kind: input, shape index: {}]
  %s7 = inlined_call_operand.vmem [shape: f32[128,8], index: 7, kind: input, shape index: {}]
  %s8 = inlined_call_operand.vmem [shape: f32[1,128], index: 8, kind: input, shape index: {}]
  %s9 = inlined_call_operand.vmem [shape: bf16[8,128], index: 9, kind: input, shape index: {}]
  %s10 = inlined_call_operand.vmem [shape: f32[1,128], index: 10, kind: input, shape index: {}]
  %s11 = inlined_call_operand.hbm [shape: bf16[128,256], index: 11, kind: input, shape index: {}]
  %s12 = inlined_call_operand.vmem [shape: f32[1,256], index: 12, kind: input, shape index: {}]
  %s13 = inlined_call_operand.hbm [shape: bf16[256,128], index: 13, kind: input, shape index: {}]
  %s14 = inlined_call_operand.vmem [shape: f32[1,128], index: 14, kind: input, shape index: {}]
  %s15 = inlined_call_operand.hbm [shape: f32[8,128], index: 15, kind: output, shape index: {0}]
  %s16 = inlined_call_operand.hbm [shape: f32[8,128], index: 16, kind: output, shape index: {1}]
  %s17 = inlined_call_operand.hbm [shape: f32[1,8,128], index: 17, kind: output, shape index: {2}]
  %18 = xla_tuple %s15, %s16, %s17
  %s19 = sld [smem:[#allocation0]]
  $region94: #{tpu_custom_call.1} parent=0
    _
  %s21 = ssub.s32 1, %s19
  %s22 = scalar_select 0, %s21, %s19
  $region1: #{tpu_custom_call.1} parent=0
    #allocation2 [shape = 'u8[65536]{0}', space=vmem, size = 0x10000, scoped, tag = 'input window, operand 11, single buffered']
    #allocation3 [shape = 's32[1]{0}', space=sflag, size = 0x4, scoped, tag = 'scoped memory for tpu_custom_call.1']
    #allocation4 [shape = 's32[1]{0}', space=sflag, size = 0x4, scoped, tag = 'scoped memory for tpu_custom_call.1']
    #allocation5 [shape = 'u8[65536]{0}', space=vmem, size = 0x10000, scoped, tag = 'input window, operand 13, single buffered']
    #allocation6 [shape = 's32[1]{0}', space=sflag, size = 0x4, scoped, tag = 'scoped memory for tpu_custom_call.1']
    #allocation7 [shape = 'u8[4096]{0}', space=vmem, size = 0x1000, scoped, tag = 'output window, operand 0, single buffered']
    #allocation8 [shape = 'u8[4096]{0}', space=vmem, size = 0x1000, scoped, tag = 'output window, operand 1, single buffered']
    #allocation9 [shape = 's32[1]{0}', space=sflag, size = 0x4, scoped, tag = 'scoped memory for tpu_custom_call.1']
    #allocation10 [shape = 'u8[4096]{0}', space=vmem, size = 0x1000, scoped, tag = 'output window, operand 2, single buffered']
    %23 = vsyncpa [#allocation3], 0
    %24 = vsyncpa [#allocation6], 0
    %25 = vsyncpa [#allocation4], 0
    %26 = vsyncpa [#allocation9], 0
    // Predicated region
    $region2: #{tpu_custom_call.1} parent=1 // pred_check
      _
    $region3: #{tpu_custom_call.1} parent=1 // pred_check_branch
      %28 = sbr.rel (0) target = $region5
    $region4: #{tpu_custom_call.1} parent=1 // pred_region
      _
    $region5: #{tpu_custom_call.1} parent=1 // pred_fallthru
      _
    // Predicated region
    $region6: #{tpu_custom_call.1} parent=1 // pred_check
      _
    $region7: #{tpu_custom_call.1} parent=1 // pred_check_branch
      %30 = sbr.rel (0) target = $region9
    $region8: #{tpu_custom_call.1} parent=1 // pred_region
      _
    $region9: #{tpu_custom_call.1} parent=1 // pred_fallthru
      _
    // Predicated region
    $region10: #{tpu_custom_call.1} parent=1 // pred_check
      _
    $region11: #{tpu_custom_call.1} parent=1 // pred_check_branch
      %32 = sbr.rel (0) target = $region13
    $region12: #{tpu_custom_call.1} parent=1 // pred_region
      _
    $region13: #{tpu_custom_call.1} parent=1 // pred_fallthru
      _
    // Predicated region
    $region14: #{tpu_custom_call.1} parent=1 // pred_check
      _
    $region15: #{tpu_custom_call.1} parent=1 // pred_check_branch
      %34 = sbr.rel (0) target = $region17
    $region16: #{tpu_custom_call.1} parent=1 // pred_region
      _
    $region17: #{tpu_custom_call.1} parent=1 // pred_fallthru
      _
    // Predicated region
    $region18: #{tpu_custom_call.1} parent=1 // pred_check
      _
    $region19: #{tpu_custom_call.1} parent=1 // pred_check_branch
      %36 = sbr.rel (0) target = $region21
    $region20: #{tpu_custom_call.1} parent=1 // pred_region
      _
    $region21: #{tpu_custom_call.1} parent=1 // pred_fallthru
      _
    // Predicated region
    $region22: #{tpu_custom_call.1} parent=1 // pred_check
      _
    $region23: #{tpu_custom_call.1} parent=1 // pred_check_branch
      %38 = sbr.rel (0) target = $region25
    $region24: #{tpu_custom_call.1} parent=1 // pred_region
      _
    $region25: #{tpu_custom_call.1} parent=1 // pred_fallthru
      _
    // Predicated region
    $region26: #{tpu_custom_call.1} parent=1 // pred_check
      _
    $region27: #{tpu_custom_call.1} parent=1 // pred_check_branch
      %40 = sbr.rel (0) target = $region29
    $region28: #{tpu_custom_call.1} parent=1 // pred_region
      _
    $region29: #{tpu_custom_call.1} parent=1 // pred_fallthru
      _
    // Predicated region
    $region30: #{tpu_custom_call.1} parent=1 // pred_check
      _
    $region31: #{tpu_custom_call.1} parent=1 // pred_check_branch
      %42 = sbr.rel (0) target = $region33
    $region32: #{tpu_custom_call.1} parent=1 // pred_region
      _
    $region33: #{tpu_custom_call.1} parent=1 // pred_fallthru
      _
    // Predicated region
    $region34: #{tpu_custom_call.1} parent=1 // pred_check
      _
    $region35: #{tpu_custom_call.1} parent=1 // pred_check_branch
      %44 = sbr.rel (0) target = $region37
    $region36: #{tpu_custom_call.1} parent=1 // pred_region
      _
    $region37: #{tpu_custom_call.1} parent=1 // pred_fallthru
      _
    // Predicated region
    $region38: #{tpu_custom_call.1} parent=1 // pred_check
      _
    $region39: #{tpu_custom_call.1} parent=1 // pred_check_branch
      %46 = sbr.rel (0) target = $region41
    $region40: #{tpu_custom_call.1} parent=1 // pred_region
      _
    $region41: #{tpu_custom_call.1} parent=1 // pred_fallthru
      _
    // Predicated region
    $region42: #{tpu_custom_call.1} parent=1 // pred_check
      _
    $region43: #{tpu_custom_call.1} parent=1 // pred_check_branch
      %48 = sbr.rel (0) target = $region45
    $region44: #{tpu_custom_call.1} parent=1 // pred_region
      _
    $region45: #{tpu_custom_call.1} parent=1 // pred_fallthru
      _
    // Predicated region
    $region46: #{tpu_custom_call.1} parent=1 // pred_check
      _
    $region47: #{tpu_custom_call.1} parent=1 // pred_check_branch
      %50 = sbr.rel (0) target = $region49
    $region48: #{tpu_custom_call.1} parent=1 // pred_region
      %52 = vsyncadd [#allocation3], 0
      %s53 = sshll.u32 %s11, 4
      %s54 = int_to_ptr.hbm [resolvable:$true] %s53
      %s55 = sshll.u32 [#allocation2], 4
      %s56 = int_to_ptr.vmem [resolvable:$true] %s55
      %61 = dma.hbm_to_vmem [thread:$0]  %s54, 2048, %s56, [#allocation3], 128, 128, 8
    $region49: #{tpu_custom_call.1} parent=1 // pred_fallthru
      _
    // Predicated region
    $region50: #{tpu_custom_call.1} parent=1 // pred_check
      _
    $region51: #{tpu_custom_call.1} parent=1 // pred_check_branch
      %63 = sbr.rel (0) target = $region53
    $region52: #{tpu_custom_call.1} parent=1 // pred_region
      _
    $region53: #{tpu_custom_call.1} parent=1 // pred_fallthru
      _
    // Predicated region
    $region54: #{tpu_custom_call.1} parent=1 // pred_check
      _
    $region55: #{tpu_custom_call.1} parent=1 // pred_check_branch
      %65 = sbr.rel (0) target = $region57
    $region56: #{tpu_custom_call.1} parent=1 // pred_region
      %67 = vsyncadd [#allocation6], 0
      %s68 = sshll.u32 %s13, 4
      %s69 = int_to_ptr.hbm [resolvable:$true] %s68
      %s70 = sshll.u32 [#allocation5], 4
      %s71 = int_to_ptr.vmem [resolvable:$true] %s70
      %76 = dma.hbm_to_vmem [thread:$0]  %s69, 2048, %s71, [#allocation6], 64, 64, 4
    $region57: #{tpu_custom_call.1} parent=1 // pred_fallthru
      _
    // Predicated region
    $region58: #{tpu_custom_call.1} parent=1 // pred_check
      _
    $region59: #{tpu_custom_call.1} parent=1 // pred_check_branch
      %78 = sbr.rel (0) target = $region61
    $region60: #{tpu_custom_call.1} parent=1 // pred_region
      _
    $region61: #{tpu_custom_call.1} parent=1 // pred_fallthru
      _
    // Predicated region
    $region62: #{tpu_custom_call.1} parent=1 // pred_check
      _
    $region63: #{tpu_custom_call.1} parent=1 // pred_check_branch
      %80 = sbr.rel (0) target = $region65
    $region64: #{tpu_custom_call.1} parent=1 // pred_region
      %82 = dma.done [#allocation3], 2048
    $region65: #{tpu_custom_call.1} parent=1 // pred_fallthru
      _
    // Predicated region
    $region66: #{tpu_custom_call.1} parent=1 // pred_check
      _
    $region67: #{tpu_custom_call.1} parent=1 // pred_check_branch
      %84 = sbr.rel (0) target = $region69
    $region68: #{tpu_custom_call.1} parent=1 // pred_region
      %86 = dma.done [#allocation6], 2048
    $region69: #{tpu_custom_call.1} parent=1 // pred_fallthru
      _
    %v88 = vld [vmem:[%s0] sm:$0xff]
    %v89 = vpack.c.bf16 %v88, %v88
    %v90 = vld [vmem:[%s1] sm:$0xff]
    %v91 = vld [vmem:[%s1 + $0x8] sm:$0xff]
    %v92 = vld [vmem:[%s2] sm:$0x3]
    %v94 = vperm.slane %v92, 0
    %v95 = vperm.slane %v92, 1
    %v100 = vunpack.c.l.b16 %v90
    %v101 = vunpack.c.h.b16 %v90
    %v102 = vunpack.c.l.b16 %v91
    %v103 = vunpack.c.h.b16 %v91
    %v104 = vpack.c.b16 %v102, %v100
    %v105 = vpack.c.b16 %v103, %v101
    %vm108 = vcmask 130048
    %v110 = vsel %vm108, %v89, 0
    %112 = vmatpush.bf16.msra.mxu0 0
    %113 = vmatpush.bf16.msra.mxu0 0
    %114 = vmatpush.bf16.msra.mxu0 0
    %115 = vmatpush.bf16.msra.mxu0 0
    %116 = vmatpush.bf16.msra.mxu0 0
    %117 = vmatpush.bf16.msra.mxu0 0
    %118 = vmatpush.bf16.msra.mxu0 0
    %119 = vmatpush.bf16.msra.mxu0 %v104
    %120 = vmatmul.bf16.gmra.mxu0 %v110
    %v121 = vpop.f32.mrf.mxu0
    %v122 = vadd.f32 %v94, %v121
    %v123 = vpop.f32.mrf.mxu0
    %124 = vdwg.mxu0
    %125 = vmatpush.bf16.msra.mxu0 0
    %126 = vmatpush.bf16.msra.mxu0 0
    %127 = vmatpush.bf16.msra.mxu0 0
    %128 = vmatpush.bf16.msra.mxu0 0
    %129 = vmatpush.bf16.msra.mxu0 0
    %130 = vmatpush.bf16.msra.mxu0 0
    %131 = vmatpush.bf16.msra.mxu0 0
    %132 = vmatpush.bf16.msra.mxu0 %v105
    %133 = vmatmul.bf16.gmra.mxu0 %v110
    %v134 = vpop.f32.mrf.mxu0
    %v135 = vadd.f32 %v95, %v134
    %v136 = vpop.f32.mrf.mxu0
    %137 = vdwg.mxu0
    %v138 = vmax.f32 %v122, 0.0
    %v139 = vmax.f32 %v135, 0.0
    %v140 = vpack.c.bf16 %v138, %v138
    %v141 = vpack.c.bf16 %v139, %v139
    %v142 = vld [vmem:[%s3] sm:$0xf]
    %v143 = vld [vmem:[%s3 + $0x4] sm:$0xf]
    %v144 = vld [vmem:[%s3 + $0x8] sm:$0xf]
    %v145 = vld [vmem:[%s3 + $0xc] sm:$0xf]
    %v146 = vld [vmem:[%s3 + $0x10] sm:$0xf]
    %v147 = vld [vmem:[%s3 + $0x14] sm:$0xf]
    %v148 = vld [vmem:[%s3 + $0x18] sm:$0xf]
    %v149 = vld [vmem:[%s3 + $0x1c] sm:$0xf]
    %v150 = vld [vmem:[%s3 + $0x20] sm:$0xf]
    %v151 = vld [vmem:[%s3 + $0x24] sm:$0xf]
    %v152 = vld [vmem:[%s3 + $0x28] sm:$0xf]
    %v153 = vld [vmem:[%s3 + $0x2c] sm:$0xf]
    %v154 = vld [vmem:[%s3 + $0x30] sm:$0xf]
    %v155 = vld [vmem:[%s3 + $0x34] sm:$0xf]
    %v156 = vld [vmem:[%s3 + $0x38] sm:$0xf]
    %v157 = vld [vmem:[%s3 + $0x3c] sm:$0xf]
    %v158 = vld [vmem:[%s3 + $0x40] sm:$0xf]
    %v159 = vld [vmem:[%s3 + $0x44] sm:$0xf]
    %v160 = vld [vmem:[%s3 + $0x48] sm:$0xf]
    %v161 = vld [vmem:[%s3 + $0x4c] sm:$0xf]
    %v162 = vld [vmem:[%s3 + $0x50] sm:$0xf]
    %v163 = vld [vmem:[%s3 + $0x54] sm:$0xf]
    %v164 = vld [vmem:[%s3 + $0x58] sm:$0xf]
    %v165 = vld [vmem:[%s3 + $0x5c] sm:$0xf]
    %v166 = vld [vmem:[%s3 + $0x60] sm:$0xf]
    %v167 = vld [vmem:[%s3 + $0x64] sm:$0xf]
    %v168 = vld [vmem:[%s3 + $0x68] sm:$0xf]
    %v169 = vld [vmem:[%s3 + $0x6c] sm:$0xf]
    %v170 = vld [vmem:[%s3 + $0x70] sm:$0xf]
    %v171 = vld [vmem:[%s3 + $0x74] sm:$0xf]
    %v172 = vld [vmem:[%s3 + $0x78] sm:$0xf]
    %v173 = vld [vmem:[%s3 + $0x7c] sm:$0xf]
    %v174 = vld [vmem:[%s4] sm:$0x1]
    %v176 = vperm.slane %v174, 0
    %v210 = vunpack.c.l.b16 %v142
    %v211 = vunpack.c.l.b16 %v143
    %v212 = vunpack.c.l.b16 %v144
    %v213 = vunpack.c.l.b16 %v145
    %v214 = vunpack.c.l.b16 %v146
    %v215 = vunpack.c.l.b16 %v147
    %v216 = vunpack.c.l.b16 %v148
    %v217 = vunpack.c.l.b16 %v149
    %v218 = vunpack.c.l.b16 %v150
    %v219 = vunpack.c.l.b16 %v151
    %v220 = vunpack.c.l.b16 %v152
    %v221 = vunpack.c.l.b16 %v153
    %v222 = vunpack.c.l.b16 %v154
    %v223 = vunpack.c.l.b16 %v155
    %v224 = vunpack.c.l.b16 %v156
    %v225 = vunpack.c.l.b16 %v157
    %v226 = vunpack.c.l.b16 %v158
    %v227 = vunpack.c.l.b16 %v159
    %v228 = vunpack.c.l.b16 %v160
    %v229 = vunpack.c.l.b16 %v161
    %v230 = vunpack.c.l.b16 %v162
    %v231 = vunpack.c.l.b16 %v163
    %v232 = vunpack.c.l.b16 %v164
    %v233 = vunpack.c.l.b16 %v165
    %v234 = vunpack.c.l.b16 %v166
    %v235 = vunpack.c.l.b16 %v167
    %v236 = vunpack.c.l.b16 %v168
    %v237 = vunpack.c.l.b16 %v169
    %v238 = vunpack.c.l.b16 %v170
    %v239 = vunpack.c.l.b16 %v171
    %v240 = vunpack.c.l.b16 %v172
    %v241 = vunpack.c.l.b16 %v173
    %v242 = vpack.c.b16 %v211, %v210
    %v243 = vpack.c.b16 %v213, %v212
    %v244 = vpack.c.b16 %v215, %v214
    %v245 = vpack.c.b16 %v217, %v216
    %v246 = vpack.c.b16 %v219, %v218
    %v247 = vpack.c.b16 %v221, %v220
    %v248 = vpack.c.b16 %v223, %v222
    %v249 = vpack.c.b16 %v225, %v224
    %v250 = vpack.c.b16 %v227, %v226
    %v251 = vpack.c.b16 %v229, %v228
    %v252 = vpack.c.b16 %v231, %v230
    %v253 = vpack.c.b16 %v233, %v232
    %v254 = vpack.c.b16 %v235, %v234
    %v255 = vpack.c.b16 %v237, %v236
    %v256 = vpack.c.b16 %v239, %v238
    %v257 = vpack.c.b16 %v241, %v240
    %274 = vmatpush.bf16.msra.mxu0 %v249
    %275 = vmatpush.bf16.msra.mxu0 %v248
    %276 = vmatpush.bf16.msra.mxu0 %v247
    %277 = vmatpush.bf16.msra.mxu0 %v246
    %278 = vmatpush.bf16.msra.mxu0 %v245
    %279 = vmatpush.bf16.msra.mxu0 %v244
    %280 = vmatpush.bf16.msra.mxu0 %v243
    %281 = vmatpush.bf16.msra.mxu0 %v242
    %282 = vmatmul.bf16.gmra.mxu0 %v140
    %v283 = vpop.f32.mrf.mxu0
    %v284 = vadd.f32 %v176, %v283
    %v285 = vpop.f32.mrf.mxu0
    %286 = vdwg.mxu0
    %287 = vmatpush.bf16.msra.mxu0 %v257
    %288 = vmatpush.bf16.msra.mxu0 %v256
    %289 = vmatpush.bf16.msra.mxu0 %v255
    %290 = vmatpush.bf16.msra.mxu0 %v254
    %291 = vmatpush.bf16.msra.mxu0 %v253
    %292 = vmatpush.bf16.msra.mxu0 %v252
    %293 = vmatpush.bf16.msra.mxu0 %v251
    %294 = vmatpush.bf16.msra.mxu0 %v250
    %295 = vmatmul.bf16.gmra.mxu0 %v141
    %v296 = vpop.f32.mrf.mxu0
    %v297 = vadd.f32 %v284, %v296
    %v298 = vpop.f32.mrf.mxu0
    %299 = vdwg.mxu0
    %v300 = vmax.f32 %v297, 0.0
    %v301 = vpack.c.bf16 %v300, %v300
    %v302 = vld [vmem:[%s5] sm:$0xf]
    %v303 = vld [vmem:[%s5 + $0x4] sm:$0xf]
    %v304 = vld [vmem:[%s5 + $0x8] sm:$0xf]
    %v305 = vld [vmem:[%s5 + $0xc] sm:$0xf]
    %v306 = vld [vmem:[%s5 + $0x10] sm:$0xf]
    %v307 = vld [vmem:[%s5 + $0x14] sm:$0xf]
    %v308 = vld [vmem:[%s5 + $0x18] sm:$0xf]
    %v309 = vld [vmem:[%s5 + $0x1c] sm:$0xf]
    %v310 = vld [vmem:[%s5 + $0x20] sm:$0xf]
    %v311 = vld [vmem:[%s5 + $0x24] sm:$0xf]
    %v312 = vld [vmem:[%s5 + $0x28] sm:$0xf]
    %v313 = vld [vmem:[%s5 + $0x2c] sm:$0xf]
    %v314 = vld [vmem:[%s5 + $0x30] sm:$0xf]
    %v315 = vld [vmem:[%s5 + $0x34] sm:$0xf]
    %v316 = vld [vmem:[%s5 + $0x38] sm:$0xf]
    %v317 = vld [vmem:[%s5 + $0x3c] sm:$0xf]
    %v318 = vld [vmem:[%s6] sm:$0x1]
    %v320 = vperm.slane %v318, 0
    %v338 = vunpack.c.l.b16 %v302
    %v339 = vunpack.c.l.b16 %v303
    %v340 = vunpack.c.l.b16 %v304
    %v341 = vunpack.c.l.b16 %v305
    %v342 = vunpack.c.l.b16 %v306
    %v343 = vunpack.c.l.b16 %v307
    %v344 = vunpack.c.l.b16 %v308
    %v345 = vunpack.c.l.b16 %v309
    %v346 = vunpack.c.l.b16 %v310
    %v347 = vunpack.c.l.b16 %v311
    %v348 = vunpack.c.l.b16 %v312
    %v349 = vunpack.c.l.b16 %v313
    %v350 = vunpack.c.l.b16 %v314
    %v351 = vunpack.c.l.b16 %v315
    %v352 = vunpack.c.l.b16 %v316
    %v353 = vunpack.c.l.b16 %v317
    %v354 = vpack.c.b16 %v339, %v338
    %v355 = vpack.c.b16 %v341, %v340
    %v356 = vpack.c.b16 %v343, %v342
    %v357 = vpack.c.b16 %v345, %v344
    %v358 = vpack.c.b16 %v347, %v346
    %v359 = vpack.c.b16 %v349, %v348
    %v360 = vpack.c.b16 %v351, %v350
    %v361 = vpack.c.b16 %v353, %v352
    %370 = vmatpush.bf16.msra.mxu0 %v361
    %371 = vmatpush.bf16.msra.mxu0 %v360
    %372 = vmatpush.bf16.msra.mxu0 %v359
    %373 = vmatpush.bf16.msra.mxu0 %v358
    %374 = vmatpush.bf16.msra.mxu0 %v357
    %375 = vmatpush.bf16.msra.mxu0 %v356
    %376 = vmatpush.bf16.msra.mxu0 %v355
    %377 = vmatpush.bf16.msra.mxu0 %v354
    %378 = vmatmul.bf16.gmra.mxu0 %v301
    %v379 = vpop.f32.mrf.mxu0
    %v380 = vadd.f32 %v320, %v379
    %v381 = vpop.f32.mrf.mxu0
    %382 = vdwg.mxu0
    %v383 = vmul.f32 %v380, %v380
    %vm384 = vcmask 64512
    %v385 = vsel %vm384, %v383, 0.0
    %386 = vadd.xlane.f32.xlu0 %v385
    %v387 = vpop.xlane.xlu0 %386
    %v388 = vld [vmem:[%s7] sm:$0xff]
    %v389 = vld [vmem:[%s7 + $0x8] sm:$0xff]
    %v390 = vld [vmem:[%s7 + $0x10] sm:$0xff]
    %v391 = vld [vmem:[%s7 + $0x18] sm:$0xff]
    %v392 = vld [vmem:[%s7 + $0x20] sm:$0xff]
    %v393 = vld [vmem:[%s7 + $0x28] sm:$0xff]
    %v394 = vld [vmem:[%s7 + $0x30] sm:$0xff]
    %v395 = vld [vmem:[%s7 + $0x38] sm:$0xff]
    %v396 = vld [vmem:[%s7 + $0x40] sm:$0xff]
    %v397 = vld [vmem:[%s7 + $0x48] sm:$0xff]
    %v398 = vld [vmem:[%s7 + $0x50] sm:$0xff]
    %v399 = vld [vmem:[%s7 + $0x58] sm:$0xff]
    %v400 = vld [vmem:[%s7 + $0x60] sm:$0xff]
    %v401 = vld [vmem:[%s7 + $0x68] sm:$0xff]
    %v402 = vld [vmem:[%s7 + $0x70] sm:$0xff]
    %v403 = vld [vmem:[%s7 + $0x78] sm:$0xff]
    %v405 = vsel %vm384, %v380, 0
    %v408 = vsel %vm384, %v388, 0
    %v411 = vsel %vm384, %v389, 0
    %v414 = vsel %vm384, %v390, 0
    %v417 = vsel %vm384, %v391, 0
    %v420 = vsel %vm384, %v392, 0
    %v423 = vsel %vm384, %v393, 0
    %v426 = vsel %vm384, %v394, 0
    %v429 = vsel %vm384, %v395, 0
    %v432 = vsel %vm384, %v396, 0
    %v435 = vsel %vm384, %v397, 0
    %v438 = vsel %vm384, %v398, 0
    %v441 = vsel %vm384, %v399, 0
    %v444 = vsel %vm384, %v400, 0
    %v447 = vsel %vm384, %v401, 0
    %v450 = vsel %vm384, %v402, 0
    %v453 = vsel %vm384, %v403, 0
    %455 = vmatpush.xpose.msra.mxu0 %v453
    %456 = vmatpush.xpose.msra.mxu0 %v450
    %457 = vmatpush.xpose.msra.mxu0 %v447
    %458 = vmatpush.xpose.msra.mxu0 %v444
    %459 = vmatpush.xpose.msra.mxu0 %v441
    %460 = vmatpush.xpose.msra.mxu0 %v438
    %461 = vmatpush.xpose.msra.mxu0 %v435
    %462 = vmatpush.xpose.msra.mxu0 %v432
    %463 = vmatpush.xpose.msra.mxu0 %v429
    %464 = vmatpush.xpose.msra.mxu0 %v426
    %465 = vmatpush.xpose.msra.mxu0 %v423
    %466 = vmatpush.xpose.msra.mxu0 %v420
    %467 = vmatpush.xpose.msra.mxu0 %v417
    %468 = vmatpush.xpose.msra.mxu0 %v414
    %469 = vmatpush.xpose.msra.mxu0 %v411
    %470 = vmatpush.xpose.msra.mxu0 %v408
    %471 = vmatmul.f32.gmra.mxu0 %v405
    %v472 = vpop.f32.mrf.mxu0
    %v473 = vadd.f32 0.0, %v472
    %474 = vdwg.mxu0
    %v475 = vld [vmem:[%s8] sm:$0x1]
    %v477 = vperm.slane %v475, 0
    %v479 = vadd.f32 %v387, %v477
    %v480 = vmul.f32 %v473, 2.0
    %v481 = vsub.f32 %v479, %v480
    %v482 = vlaneseq
    %v483 = vand.u32 %v482, 127
    %484 = vmin.xlane.f32.xlu0 %v481
    %v485 = vpop.xlane.xlu0 %484
    %vm486 = vcmp.eq.f32.partialorder %v481, %v485
    %v487 = vsel %vm486, %v483, 128
    %v488 = vand.u32 %v487, 65535
    %v489 = vshra.s32 %v487, 16
    %v490 = vcvt.s32.f32 %v488
    %v491 = vcvt.s32.f32 %v489
    %492 = vmin.xlane.f32.xlu0 %v491
    %v493 = vpop.xlane.xlu0 %492
    %vm494 = vcmp.eq.f32.partialorder %v491, %v493
    %v495 = vsel %vm494, %v490, inf
    %496 = vmin.xlane.f32.xlu0 %v495
    %v497 = vpop.xlane.xlu0 %496
    %v498 = vcvt.f32.s32 %v497
    %v499 = vcvt.f32.s32 %v493
    %v500 = vshll.u32 %v499, 16
    %v501 = vadd.s32 %v500, %v498
    %vm502 = vcmp.eq.s32.totalorder %v483, %v501
    %v503 = vsel %vm502, 1, 0
    %v504 = vcvt.s32.f32 %v503
    %505 = vmatpush.msra.mxu0 %v403
    %506 = vmatpush.msra.mxu0 %v402
    %507 = vmatpush.msra.mxu0 %v401
    %508 = vmatpush.msra.mxu0 %v400
    %509 = vmatpush.msra.mxu0 %v399
    %510 = vmatpush.msra.mxu0 %v398
    %511 = vmatpush.msra.mxu0 %v397
    %512 = vmatpush.msra.mxu0 %v396
    %513 = vmatpush.msra.mxu0 %v395
    %514 = vmatpush.msra.mxu0 %v394
    %515 = vmatpush.msra.mxu0 %v393
    %516 = vmatpush.msra.mxu0 %v392
    %517 = vmatpush.msra.mxu0 %v391
    %518 = vmatpush.msra.mxu0 %v390
    %519 = vmatpush.msra.mxu0 %v389
    %520 = vmatpush.msra.mxu0 %v388
    %521 = vmatmul.f32.gmra.mxu0 %v504
    %v522 = vpop.f32.mrf.mxu0
    %v523 = vadd.f32 0.0, %v522
    %524 = vdwg.mxu0
    %s525 = smul.u32 0, 8
    %v526 = vlaneseq
    %v527 = vshrl.u32 %v526, 7
    %v528 = vstv %s525
    %v529 = vadd.s32 %v528, %v527
    %vm530 = vcmp.lt.s32.totalorder %v529, 8
    %v531 = vsel %vm530, 1, 0
    %v532 = vcvt.s32.f32 %v531
    %v533 = vsub.f32 %v523, %v380
    %v534 = vmul.f32 %v533, %v533
    %v535 = vmul.f32 %v534, %v532
    %v536 = vsel %vm384, %v535, 0.0
    %537 = vadd.xlane.f32.xlu0 %v536
    %v538 = vpop.xlane.xlu0 %537
    %v539 = vrot.slane %v538, 4
    %v540 = vadd.f32 %v538, %v539
    %v541 = vrot.slane %v540, 2
    %v542 = vadd.f32 %v540, %v541
    %v543 = vrot.slane %v542, 1
    %v544 = vadd.f32 %v542, %v543
    %s545 = vtos %v544
    %v546 = vstv %s545
    %547 = vst [vmem:[#allocation10] sm:$0xff] %v546
    %548 = vst [vmem:[#allocation8] sm:$0xff] %v504
    %v549 = vpack.c.bf16 %v523, %v523
    %v550 = vld [vmem:[%s9] sm:$0xf]
    %v551 = vld [vmem:[%s10] sm:$0x1]
    %v553 = vperm.slane %v551, 0
    %v556 = vsel %vm384, %v549, 0
    %vm558 = vcmask 1043456
    %v560 = vsel %vm558, %v550, 0
    %562 = vmatpush.bf16.msra.mxu0 0
    %563 = vmatpush.bf16.msra.mxu0 0
    %564 = vmatpush.bf16.msra.mxu0 0
    %565 = vmatpush.bf16.msra.mxu0 0
    %566 = vmatpush.bf16.msra.mxu0 0
    %567 = vmatpush.bf16.msra.mxu0 0
    %568 = vmatpush.bf16.msra.mxu0 0
    %569 = vmatpush.bf16.msra.mxu0 %v560
    %570 = vmatmul.bf16.gmra.mxu0 %v556
    %v571 = vpop.f32.mrf.mxu0
    %v572 = vadd.f32 %v553, %v571
    %v573 = vpop.f32.mrf.mxu0
    %574 = vdwg.mxu0
    %v575 = vmax.f32 %v572, 0.0
    %v576 = vpack.c.bf16 %v575, %v575
    %v577 = vld [vmem:[#allocation2] sm:$0xff]
    %v578 = vld [vmem:[#allocation2 + $0x8] sm:$0xff]
    %v579 = vld [vmem:[#allocation2 + $0x10] sm:$0xff]
    %v580 = vld [vmem:[#allocation2 + $0x18] sm:$0xff]
    %v581 = vld [vmem:[#allocation2 + $0x20] sm:$0xff]
    %v582 = vld [vmem:[#allocation2 + $0x28] sm:$0xff]
    %v583 = vld [vmem:[#allocation2 + $0x30] sm:$0xff]
    %v584 = vld [vmem:[#allocation2 + $0x38] sm:$0xff]
    %v585 = vld [vmem:[#allocation2 + $0x40] sm:$0xff]
    %v586 = vld [vmem:[#allocation2 + $0x48] sm:$0xff]
    %v587 = vld [vmem:[#allocation2 + $0x50] sm:$0xff]
    %v588 = vld [vmem:[#allocation2 + $0x58] sm:$0xff]
    %v589 = vld [vmem:[#allocation2 + $0x60] sm:$0xff]
    %v590 = vld [vmem:[#allocation2 + $0x68] sm:$0xff]
    %v591 = vld [vmem:[#allocation2 + $0x70] sm:$0xff]
    %v592 = vld [vmem:[#allocation2 + $0x78] sm:$0xff]
    %v593 = vld [vmem:[%s12] sm:$0x3]
    %v595 = vperm.slane %v593, 0
    %v596 = vperm.slane %v593, 1
    %v615 = vunpack.c.l.b16 %v577
    %v616 = vunpack.c.h.b16 %v577
    %v617 = vunpack.c.l.b16 %v578
    %v618 = vunpack.c.h.b16 %v578
    %v619 = vunpack.c.l.b16 %v579
    %v620 = vunpack.c.h.b16 %v579
    %v621 = vunpack.c.l.b16 %v580
    %v622 = vunpack.c.h.b16 %v580
    %v623 = vunpack.c.l.b16 %v581
    %v624 = vunpack.c.h.b16 %v581
    %v625 = vunpack.c.l.b16 %v582
    %v626 = vunpack.c.h.b16 %v582
    %v627 = vunpack.c.l.b16 %v583
    %v628 = vunpack.c.h.b16 %v583
    %v629 = vunpack.c.l.b16 %v584
    %v630 = vunpack.c.h.b16 %v584
    %v631 = vunpack.c.l.b16 %v585
    %v632 = vunpack.c.h.b16 %v585
    %v633 = vunpack.c.l.b16 %v586
    %v634 = vunpack.c.h.b16 %v586
    %v635 = vunpack.c.l.b16 %v587
    %v636 = vunpack.c.h.b16 %v587
    %v637 = vunpack.c.l.b16 %v588
    %v638 = vunpack.c.h.b16 %v588
    %v639 = vunpack.c.l.b16 %v589
    %v640 = vunpack.c.h.b16 %v589
    %v641 = vunpack.c.l.b16 %v590
    %v642 = vunpack.c.h.b16 %v590
    %v643 = vunpack.c.l.b16 %v591
    %v644 = vunpack.c.h.b16 %v591
    %v645 = vunpack.c.l.b16 %v592
    %v646 = vunpack.c.h.b16 %v592
    %v647 = vpack.c.b16 %v617, %v615
    %v648 = vpack.c.b16 %v618, %v616
    %v649 = vpack.c.b16 %v621, %v619
    %v650 = vpack.c.b16 %v622, %v620
    %v651 = vpack.c.b16 %v625, %v623
    %v652 = vpack.c.b16 %v626, %v624
    %v653 = vpack.c.b16 %v629, %v627
    %v654 = vpack.c.b16 %v630, %v628
    %v655 = vpack.c.b16 %v633, %v631
    %v656 = vpack.c.b16 %v634, %v632
    %v657 = vpack.c.b16 %v637, %v635
    %v658 = vpack.c.b16 %v638, %v636
    %v659 = vpack.c.b16 %v641, %v639
    %v660 = vpack.c.b16 %v642, %v640
    %v661 = vpack.c.b16 %v645, %v643
    %v662 = vpack.c.b16 %v646, %v644
    %679 = vmatpush.bf16.msra.mxu0 %v661
    %680 = vmatpush.bf16.msra.mxu0 %v659
    %681 = vmatpush.bf16.msra.mxu0 %v657
    %682 = vmatpush.bf16.msra.mxu0 %v655
    %683 = vmatpush.bf16.msra.mxu0 %v653
    %684 = vmatpush.bf16.msra.mxu0 %v651
    %685 = vmatpush.bf16.msra.mxu0 %v649
    %686 = vmatpush.bf16.msra.mxu0 %v647
    %687 = vmatmul.bf16.gmra.mxu0 %v576
    %v688 = vpop.f32.mrf.mxu0
    %v689 = vadd.f32 %v595, %v688
    %v690 = vpop.f32.mrf.mxu0
    %691 = vdwg.mxu0
    %692 = vmatpush.bf16.msra.mxu0 %v662
    %693 = vmatpush.bf16.msra.mxu0 %v660
    %694 = vmatpush.bf16.msra.mxu0 %v658
    %695 = vmatpush.bf16.msra.mxu0 %v656
    %696 = vmatpush.bf16.msra.mxu0 %v654
    %697 = vmatpush.bf16.msra.mxu0 %v652
    %698 = vmatpush.bf16.msra.mxu0 %v650
    %699 = vmatpush.bf16.msra.mxu0 %v648
    %700 = vmatmul.bf16.gmra.mxu0 %v576
    %v701 = vpop.f32.mrf.mxu0
    %v702 = vadd.f32 %v596, %v701
    %v703 = vpop.f32.mrf.mxu0
    %704 = vdwg.mxu0
    %v705 = vmax.f32 %v689, 0.0
    %v706 = vmax.f32 %v702, 0.0
    %v707 = vpack.c.bf16 %v705, %v705
    %v708 = vpack.c.bf16 %v706, %v706
    %v709 = vld [vmem:[#allocation5] sm:$0xf]
    %v710 = vld [vmem:[#allocation5 + $0x4] sm:$0xf]
    %v711 = vld [vmem:[#allocation5 + $0x8] sm:$0xf]
    %v712 = vld [vmem:[#allocation5 + $0xc] sm:$0xf]
    %v713 = vld [vmem:[#allocation5 + $0x10] sm:$0xf]
    %v714 = vld [vmem:[#allocation5 + $0x14] sm:$0xf]
    %v715 = vld [vmem:[#allocation5 + $0x18] sm:$0xf]
    %v716 = vld [vmem:[#allocation5 + $0x1c] sm:$0xf]
    %v717 = vld [vmem:[#allocation5 + $0x20] sm:$0xf]
    %v718 = vld [vmem:[#allocation5 + $0x24] sm:$0xf]
    %v719 = vld [vmem:[#allocation5 + $0x28] sm:$0xf]
    %v720 = vld [vmem:[#allocation5 + $0x2c] sm:$0xf]
    %v721 = vld [vmem:[#allocation5 + $0x30] sm:$0xf]
    %v722 = vld [vmem:[#allocation5 + $0x34] sm:$0xf]
    %v723 = vld [vmem:[#allocation5 + $0x38] sm:$0xf]
    %v724 = vld [vmem:[#allocation5 + $0x3c] sm:$0xf]
    %v725 = vld [vmem:[#allocation5 + $0x40] sm:$0xf]
    %v726 = vld [vmem:[#allocation5 + $0x44] sm:$0xf]
    %v727 = vld [vmem:[#allocation5 + $0x48] sm:$0xf]
    %v728 = vld [vmem:[#allocation5 + $0x4c] sm:$0xf]
    %v729 = vld [vmem:[#allocation5 + $0x50] sm:$0xf]
    %v730 = vld [vmem:[#allocation5 + $0x54] sm:$0xf]
    %v731 = vld [vmem:[#allocation5 + $0x58] sm:$0xf]
    %v732 = vld [vmem:[#allocation5 + $0x5c] sm:$0xf]
    %v733 = vld [vmem:[#allocation5 + $0x60] sm:$0xf]
    %v734 = vld [vmem:[#allocation5 + $0x64] sm:$0xf]
    %v735 = vld [vmem:[#allocation5 + $0x68] sm:$0xf]
    %v736 = vld [vmem:[#allocation5 + $0x6c] sm:$0xf]
    %v737 = vld [vmem:[#allocation5 + $0x70] sm:$0xf]
    %v738 = vld [vmem:[#allocation5 + $0x74] sm:$0xf]
    %v739 = vld [vmem:[#allocation5 + $0x78] sm:$0xf]
    %v740 = vld [vmem:[#allocation5 + $0x7c] sm:$0xf]
    %v741 = vld [vmem:[%s14] sm:$0x1]
    %v743 = vperm.slane %v741, 0
    %v777 = vunpack.c.l.b16 %v709
    %v778 = vunpack.c.l.b16 %v710
    %v779 = vunpack.c.l.b16 %v711
    %v780 = vunpack.c.l.b16 %v712
    %v781 = vunpack.c.l.b16 %v713
    %v782 = vunpack.c.l.b16 %v714
    %v783 = vunpack.c.l.b16 %v715
    %v784 = vunpack.c.l.b16 %v716
    %v785 = vunpack.c.l.b16 %v717
    %v786 = vunpack.c.l.b16 %v718
    %v787 = vunpack.c.l.b16 %v719
    %v788 = vunpack.c.l.b16 %v720
    %v789 = vunpack.c.l.b16 %v721
    %v790 = vunpack.c.l.b16 %v722
    %v791 = vunpack.c.l.b16 %v723
    %v792 = vunpack.c.l.b16 %v724
    %v793 = vunpack.c.l.b16 %v725
    %v794 = vunpack.c.l.b16 %v726
    %v795 = vunpack.c.l.b16 %v727
    %v796 = vunpack.c.l.b16 %v728
    %v797 = vunpack.c.l.b16 %v729
    %v798 = vunpack.c.l.b16 %v730
    %v799 = vunpack.c.l.b16 %v731
    %v800 = vunpack.c.l.b16 %v732
    %v801 = vunpack.c.l.b16 %v733
    %v802 = vunpack.c.l.b16 %v734
    %v803 = vunpack.c.l.b16 %v735
    %v804 = vunpack.c.l.b16 %v736
    %v805 = vunpack.c.l.b16 %v737
    %v806 = vunpack.c.l.b16 %v738
    %v807 = vunpack.c.l.b16 %v739
    %v808 = vunpack.c.l.b16 %v740
    %v809 = vpack.c.b16 %v778, %v777
    %v810 = vpack.c.b16 %v780, %v779
    %v811 = vpack.c.b16 %v782, %v781
    %v812 = vpack.c.b16 %v784, %v783
    %v813 = vpack.c.b16 %v786, %v785
    %v814 = vpack.c.b16 %v788, %v787
    %v815 = vpack.c.b16 %v790, %v789
    %v816 = vpack.c.b16 %v792, %v791
    %v817 = vpack.c.b16 %v794, %v793
    %v818 = vpack.c.b16 %v796, %v795
    %v819 = vpack.c.b16 %v798, %v797
    %v820 = vpack.c.b16 %v800, %v799
    %v821 = vpack.c.b16 %v802, %v801
    %v822 = vpack.c.b16 %v804, %v803
    %v823 = vpack.c.b16 %v806, %v805
    %v824 = vpack.c.b16 %v808, %v807
    %841 = vmatpush.bf16.msra.mxu0 %v816
    %842 = vmatpush.bf16.msra.mxu0 %v815
    %843 = vmatpush.bf16.msra.mxu0 %v814
    %844 = vmatpush.bf16.msra.mxu0 %v813
    %845 = vmatpush.bf16.msra.mxu0 %v812
    %846 = vmatpush.bf16.msra.mxu0 %v811
    %847 = vmatpush.bf16.msra.mxu0 %v810
    %848 = vmatpush.bf16.msra.mxu0 %v809
    %849 = vmatmul.bf16.gmra.mxu0 %v707
    %v850 = vpop.f32.mrf.mxu0
    %v851 = vadd.f32 %v743, %v850
    %v852 = vpop.f32.mrf.mxu0
    %853 = vdwg.mxu0
    %854 = vmatpush.bf16.msra.mxu0 %v824
    %855 = vmatpush.bf16.msra.mxu0 %v823
    %856 = vmatpush.bf16.msra.mxu0 %v822
    %857 = vmatpush.bf16.msra.mxu0 %v821
    %858 = vmatpush.bf16.msra.mxu0 %v820
    %859 = vmatpush.bf16.msra.mxu0 %v819
    %860 = vmatpush.bf16.msra.mxu0 %v818
    %861 = vmatpush.bf16.msra.mxu0 %v817
    %862 = vmatmul.bf16.gmra.mxu0 %v708
    %v863 = vpop.f32.mrf.mxu0
    %v864 = vadd.f32 %v851, %v863
    %v865 = vpop.f32.mrf.mxu0
    %866 = vdwg.mxu0
    %867 = vst [vmem:[#allocation7] sm:$0xff] %v864
    // Predicated region
    $region70: #{tpu_custom_call.1} parent=1 // pred_check
      _
    $region71: #{tpu_custom_call.1} parent=1 // pred_check_branch
      %869 = sbr.rel (0) target = $region73
    $region72: #{tpu_custom_call.1} parent=1 // pred_region
      %871 = vsyncadd [#allocation4], 0
      %s873 = sshll.u32 [#allocation7], 4
      %s874 = int_to_ptr.vmem [resolvable:$true] %s873
      %s875 = sshll.u32 %s15, 4
      %s876 = int_to_ptr.hbm [resolvable:$true] %s875
      %878 = dma.vmem_to_hbm [thread:$0]  %s874, 128, %s876, [#allocation4]
    $region73: #{tpu_custom_call.1} parent=1 // pred_fallthru
      _
    // Predicated region
    $region74: #{tpu_custom_call.1} parent=1 // pred_check
      _
    $region75: #{tpu_custom_call.1} parent=1 // pred_check_branch
      %880 = sbr.rel (0) target = $region77
    $region76: #{tpu_custom_call.1} parent=1 // pred_region
      %882 = vsyncadd [#allocation9], 0
      %s884 = sshll.u32 [#allocation8], 4
      %s885 = int_to_ptr.vmem [resolvable:$true] %s884
      %s886 = sshll.u32 %s16, 4
      %s887 = int_to_ptr.hbm [resolvable:$true] %s886
      %889 = dma.vmem_to_hbm [thread:$0]  %s885, 128, %s887, [#allocation9]
    $region77: #{tpu_custom_call.1} parent=1 // pred_fallthru
      _
    // Predicated region
    $region78: #{tpu_custom_call.1} parent=1 // pred_check
      _
    $region79: #{tpu_custom_call.1} parent=1 // pred_check_branch
      %891 = sbr.rel (0) target = $region81
    $region80: #{tpu_custom_call.1} parent=1 // pred_region
      %893 = vsyncadd [#allocation9], 0
      %s895 = sshll.u32 [#allocation10], 4
      %s896 = int_to_ptr.vmem [resolvable:$true] %s895
      %s897 = sshll.u32 %s17, 4
      %s898 = int_to_ptr.hbm [resolvable:$true] %s897
      %900 = dma.vmem_to_hbm [thread:$0]  %s896, 128, %s898, [#allocation9]
    $region81: #{tpu_custom_call.1} parent=1 // pred_fallthru
      _
    // Predicated region
    $region82: #{tpu_custom_call.1} parent=1 // pred_check
      _
    $region83: #{tpu_custom_call.1} parent=1 // pred_check_branch
      %902 = sbr.rel (0) target = $region85
    $region84: #{tpu_custom_call.1} parent=1 // pred_region
      %904 = dma.done [#allocation4], 128
    $region85: #{tpu_custom_call.1} parent=1 // pred_fallthru
      _
    // Predicated region
    $region86: #{tpu_custom_call.1} parent=1 // pred_check
      _
    $region87: #{tpu_custom_call.1} parent=1 // pred_check_branch
      %906 = sbr.rel (0) target = $region89
    $region88: #{tpu_custom_call.1} parent=1 // pred_region
      %908 = dma.done [#allocation9], 128
    $region89: #{tpu_custom_call.1} parent=1 // pred_fallthru
      _
    // Predicated region
    $region90: #{tpu_custom_call.1} parent=1 // pred_check
      _
    $region91: #{tpu_custom_call.1} parent=1 // pred_check_branch
      %910 = sbr.rel (0) target = $region93
    $region92: #{tpu_custom_call.1} parent=1 // pred_region
      %912 = dma.done [#allocation9], 128
    $region93: #{tpu_custom_call.1} parent=1 // pred_fallthru
      _
    %913 = vsyncpa [#allocation3], 1
    %914 = vsyncpa [#allocation6], 1
    %915 = vsyncpa [#allocation4], 1
    %916 = vsyncpa [#allocation9], 1

</llo_original>
